<compile_context>
chip_gen: v7x
topology: tpu7x:2x2x1
jax: 0.10.0
libtpu: 0.0.40
codegen_flags: <defaults>
</compile_context>

<pallas_src>
import math
import functools

import jax
import jax.numpy as jnp
from jax.experimental import pallas as pl
from jax.experimental.pallas import tpu as pltpu


# --------------------------------------------------------------------------
# helpers
# --------------------------------------------------------------------------
def _pick_tile(dim, preferred):
    """Largest preferred tile that evenly divides `dim`, else the full dim."""
    for t in preferred:
        if t <= dim and dim % t == 0:
            return t
    return dim


_VMEM_LIMIT = 32 * 1024 * 1024  # safe on v5e/v6e/v7x; plenty for these tiles


# --------------------------------------------------------------------------
# tiled linear (matmul + bias) kernel:  out = x @ w + b
# --------------------------------------------------------------------------
def _linear_kernel(x_ref, w_ref, b_ref, o_ref, acc_ref):
    @pl.when(pl.program_id(2) == 0)
    def _init():
        acc_ref[...] = jnp.zeros_like(acc_ref)

    # bf16 MXU operands, f32 accumulation (v5e has no native f32 MXU path).
    acc_ref[...] += jnp.dot(x_ref[...].astype(jnp.bfloat16),
                            w_ref[...].astype(jnp.bfloat16),
                            preferred_element_type=jnp.float32)

    @pl.when(pl.program_id(2) == pl.num_programs(2) - 1)
    def _store():
        o_ref[...] = (acc_ref[...] + b_ref[...]).astype(o_ref.dtype)


def _linear(x2d, w, b):
    M, K = x2d.shape
    _, N = w.shape
    tm = _pick_tile(M, (512, 256, 128))
    tn = _pick_tile(N, (512, 256, 128))
    tk = _pick_tile(K, (1024, 512, 256))
    grid = (M // tm, N // tn, K // tk)

    cost = pl.CostEstimate(
        flops=2 * M * N * K,
        transcendentals=0,
        bytes_accessed=4 * (M * K + K * N + M * N + N))

    return pl.pallas_call(
        _linear_kernel,
        out_shape=jax.ShapeDtypeStruct((M, N), x2d.dtype),
        grid_spec=pltpu.PrefetchScalarGridSpec(
            num_scalar_prefetch=0,
            grid=grid,
            in_specs=[
                pl.BlockSpec((tm, tk), lambda i, j, kk: (i, kk)),   # x
                pl.BlockSpec((tk, tn), lambda i, j, kk: (kk, j)),   # w
                pl.BlockSpec((1, tn), lambda i, j, kk: (0, j)),     # b
            ],
            out_specs=pl.BlockSpec((tm, tn), lambda i, j, kk: (i, j)),
            scratch_shapes=[pltpu.VMEM((tm, tn), jnp.float32)],
        ),
        compiler_params=pltpu.CompilerParams(
            dimension_semantics=("parallel", "parallel", "arbitrary"),
            vmem_limit_bytes=_VMEM_LIMIT),
        cost_estimate=cost,
    )(x2d, w, b)


# --------------------------------------------------------------------------
# flash-style causal attention kernel (heads batched inside the block)
# --------------------------------------------------------------------------
def _flash_attn_kernel(q_ref, k_ref, v_ref, o_ref, m_ref, l_ref, acc_ref,
                       *, tq, tkv):
    qi = pl.program_id(1)
    ki = pl.program_id(2)
    nkv = pl.num_programs(2)

    @pl.when(ki == 0)
    def _init():
        m_ref[...] = jnp.full_like(m_ref, -jnp.inf)
        l_ref[...] = jnp.zeros_like(l_ref)
        acc_ref[...] = jnp.zeros_like(acc_ref)

    # Causal tile skipping: a kv tile whose first column index exceeds the last
    # row index of this q tile is fully masked -> skip both matmuls.
    @pl.when(ki * tkv <= qi * tq + (tq - 1))
    def _compute():
        q = q_ref[0].astype(jnp.bfloat16)          # (H, tq, hd) (scale prefolded)
        k = k_ref[0].astype(jnp.bfloat16)          # (H, tkv, hd)
        v = v_ref[0].astype(jnp.bfloat16)          # (H, tkv, hd)

        # Head-batched QK^T, contracting on head_dim (no explicit transpose).
        s = jax.lax.dot_general(
            q, k, (((2,), (2,)), ((0,), (0,))),
            preferred_element_type=jnp.float32)     # (H, tq, tkv)

        row = qi * tq + jax.lax.broadcasted_iota(jnp.int32, (tq, tkv), 0)
        col = ki * tkv + jax.lax.broadcasted_iota(jnp.int32, (tq, tkv), 1)
        s = jnp.where((row >= col)[None, :, :], s, -jnp.inf)

        m_prev = m_ref[...]
        m_new = jnp.maximum(m_prev, jnp.max(s, axis=-1, keepdims=True))
        alpha = jnp.exp(m_prev - m_new)
        p = jnp.exp(s - m_new)
        # TODO(synk): att_w_dropout is identity here (eval-mode semantics).
        l_ref[...] = alpha * l_ref[...] + jnp.sum(p, axis=-1, keepdims=True)
        acc_ref[...] = alpha * acc_ref[...] + jax.lax.dot_general(
            p.astype(jnp.bfloat16), v, (((2,), (1,)), ((0,), (0,))),
            preferred_element_type=jnp.float32)      # (H, tq, hd)
        m_ref[...] = m_new

    @pl.when(ki == nkv - 1)
    def _finalize():
        inv_l = pl.reciprocal(l_ref[...], approx=True)   # EUP vrcp, ~free
        o_ref[0] = (acc_ref[...] * inv_l).astype(o_ref.dtype)


def _flash_attention(q, k, v):
    """q, k, v: (B, H, T, hd) with the softmax scale already folded into q."""
    B, H, T, hd = q.shape
    tq = _pick_tile(T, (256, 128))
    tkv = tq
    nq, nkv = T // tq, T // tkv

    kernel = functools.partial(_flash_attn_kernel, tq=tq, tkv=tkv)
    cost = pl.CostEstimate(
        flops=2 * 2 * B * H * T * T * hd,
        transcendentals=B * H * T * T,
        bytes_accessed=4 * 4 * B * H * T * hd)

    return pl.pallas_call(
        kernel,
        out_shape=jax.ShapeDtypeStruct((B, H, T, hd), q.dtype),
        grid_spec=pltpu.PrefetchScalarGridSpec(
            num_scalar_prefetch=0,
            grid=(B, nq, nkv),
            in_specs=[
                pl.BlockSpec((1, H, tq, hd), lambda b, qi, ki: (b, 0, qi, 0)),
                pl.BlockSpec((1, H, tkv, hd), lambda b, qi, ki: (b, 0, ki, 0)),
                pl.BlockSpec((1, H, tkv, hd), lambda b, qi, ki: (b, 0, ki, 0)),
            ],
            out_specs=pl.BlockSpec((1, H, tq, hd),
                                   lambda b, qi, ki: (b, 0, qi, 0)),
            scratch_shapes=[
                pltpu.VMEM((H, tq, 1), jnp.float32),    # running max m
                pltpu.VMEM((H, tq, 1), jnp.float32),    # running denom l
                pltpu.VMEM((H, tq, hd), jnp.float32),   # running acc
            ],
        ),
        compiler_params=pltpu.CompilerParams(
            dimension_semantics=("parallel", "parallel", "arbitrary"),
            vmem_limit_bytes=_VMEM_LIMIT),
        cost_estimate=cost,
    )(q, k, v)


# --------------------------------------------------------------------------
# full module forward
# --------------------------------------------------------------------------
def causal_self_attention(x, wqkv, bqkv, wout, bout, *, num_heads):
    """x: (B, T, E) float32.  Weights follow y = x @ W + b convention."""
    B, T, E = x.shape
    hd = E // num_heads
    scale = 1.0 / math.sqrt(hd)

    # Fold the 1/sqrt(hd) attention scale into the Q columns of Wqkv / bqkv.
    # Done once on the weights -> saves the per-step (T,T) VPU multiply.
    col_scale = jnp.concatenate(
        [jnp.full((E,), scale, dtype=wqkv.dtype),
         jnp.ones((2 * E,), dtype=wqkv.dtype)])
    wqkv_s = wqkv * col_scale[None, :]
    bqkv_s = bqkv * col_scale[None, :]

    # QKV projection: (B*T, E) @ (E, 3E) + b
    qkv = _linear(x.reshape(B * T, E), wqkv_s, bqkv_s)           # (B*T, 3E)
    qkv = qkv.reshape(B, T, 3, num_heads, hd).transpose(2, 0, 3, 1, 4)
    q, k, v = qkv[0], qkv[1], qkv[2]                             # (B, H, T, hd)

    # Flash-style causal attention (heads batched, kv tiles skipped above diag).
    y = _flash_attention(q, k, v)                                # (B, H, T, hd)
    y = y.transpose(0, 2, 1, 3).reshape(B * T, E)

    # Output projection: (B*T, E) @ (E, E) + b
    out = _linear(y, wout, bout)
    # TODO(synk): res_dropout is identity here (eval-mode semantics).
    return out.reshape(B, T, E)


# --------------------------------------------------------------------------
# pure-JAX reference (f32, mirrors the PyTorch forward, dropout = identity)
# --------------------------------------------------------------------------
def reference(x, wqkv, bqkv, wout, bout, *, num_heads):
    B, T, E = x.shape
    hd = E // num_heads
    scale = 1.0 / math.sqrt(hd)
    qkv = x @ wqkv + bqkv[0]                                      # (B, T, 3E)
    q, k, v = jnp.split(qkv, 3, axis=-1)

    def heads(a):
        return a.reshape(B, T, num_heads, hd).transpose(0, 2, 1, 3)

    q, k, v = heads(q), heads(k), heads(v)                        # (B, H, T, hd)
    attn = jnp.einsum('bhqd,bhkd->bhqk', q, k) * scale
    mask = jnp.tril(jnp.ones((T, T), dtype=bool))
    attn = jnp.where(mask[None, None], attn, float('-inf'))
    attn = jax.nn.softmax(attn, axis=-1)
    y = jnp.einsum('bhqk,bhkd->bhqd', attn, v)
    y = y.transpose(0, 2, 1, 3).reshape(B, T, E)
    return y @ wout + bout[0]


if __name__ == "__main__":
    B, T, E, H = 2, 8, 32, 4   # batch, seq, embed_dim, num_heads (block_size = T)

    key = jax.random.PRNGKey(0)
    kx, k1, k2, k3, k4 = jax.random.split(key, 5)

    x = jax.random.normal(kx, (B, T, E), dtype=jnp.float32)
    # Deterministic parameter init (synthetic; matches nn.Linear shapes).
    wqkv = jax.random.normal(k1, (E, 3 * E), dtype=jnp.float32) * (1.0 / math.sqrt(E))
    bqkv = jax.random.normal(k2, (1, 3 * E), dtype=jnp.float32) * 0.01
    wout = jax.random.normal(k3, (E, E), dtype=jnp.float32) * (1.0 / math.sqrt(E))
    bout = jax.random.normal(k4, (1, E), dtype=jnp.float32) * 0.01

    out = causal_self_attention(x, wqkv, bqkv, wout, bout, num_heads=H)
    out = jax.block_until_ready(out)

    ref = reference(x, wqkv, bqkv, wout, bout, num_heads=H)
    assert out.shape == (B, T, E)
    # Tolerance loosened vs the pure-f32 reference: the kernel uses bf16 MXU
    # operands (f32 accumulation) and an approximate EUP reciprocal.
    err = float(jnp.max(jnp.abs(out - ref)))
    assert jnp.allclose(out, ref, atol=5e-2, rtol=5e-2), f"mismatch vs reference (max abs err={err})"

    print("KERNEL_OK")
</pallas_src>

<mosaic_0001>
module attributes {stable_mosaic.version = 11 : i64} {
  func.func @_linear_kernel(%arg0: i32, %arg1: i32, %arg2: i32, %arg3: memref<16x32xf32, #tpu.memory_space<vmem>>, %arg4: memref<32x96xf32, #tpu.memory_space<vmem>>, %arg5: memref<1x96xf32, #tpu.memory_space<vmem>>, %arg6: memref<16x96xf32, #tpu.memory_space<vmem>>, %arg7: memref<16x96xf32, #tpu.memory_space<vmem>>) attributes {dimension_semantics = [#tpu.dimension_semantics<parallel>, #tpu.dimension_semantics<parallel>, #tpu.dimension_semantics<arbitrary>], iteration_bounds = array<i64: 1, 1, 1>, scalar_prefetch = 0 : i64, scratch_operands = 1 : i64, tpu.core_type = #tpu.core_type<tc>, window_params = [{transform_indices = @transform_0, window_bounds = array<i64: 16, 32>}, {transform_indices = @transform_1, window_bounds = array<i64: 32, 96>}, {transform_indices = @transform_2, window_bounds = array<i64: 1, 96>}, {transform_indices = @transform_3, window_bounds = array<i64: 16, 96>}]} {
    %c0_i32 = arith.constant 0 : i32
    %0 = arith.cmpi eq, %arg2, %c0_i32 : i32
    %1 = arith.extui %0 : i1 to i32
    %c0_i32_0 = arith.constant 0 : i32
    %2 = arith.cmpi ne, %1, %c0_i32_0 : i32
    scf.if %2 {
      %cst_10 = arith.constant 0.000000e+00 : f32
      %14 = vector.broadcast %cst_10 : f32 to vector<16x96xf32>
      %c0_11 = arith.constant 0 : index
      %c0_12 = arith.constant 0 : index
      %15 = vector.load %arg7[%c0_11, %c0_12] : memref<16x96xf32, #tpu.memory_space<vmem>>, vector<16x96xf32>
      tpu.vector_store %arg7[%c0_11, %c0_12], %14 {strides = array<i32>} : memref<16x96xf32, #tpu.memory_space<vmem>>, vector<16x96xf32>,
    } else {
    }
    %c0 = arith.constant 0 : index
    %c0_1 = arith.constant 0 : index
    %3 = vector.load %arg7[%c0, %c0_1] : memref<16x96xf32, #tpu.memory_space<vmem>>, vector<16x96xf32>
    %c0_2 = arith.constant 0 : index
    %c0_3 = arith.constant 0 : index
    %4 = vector.load %arg3[%c0_2, %c0_3] : memref<16x32xf32, #tpu.memory_space<vmem>>, vector<16x32xf32>
    %5 = arith.truncf %4 : vector<16x32xf32> to vector<16x32xbf16>
    %c0_4 = arith.constant 0 : index
    %c0_5 = arith.constant 0 : index
    %6 = vector.load %arg4[%c0_4, %c0_5] : memref<32x96xf32, #tpu.memory_space<vmem>>, vector<32x96xf32>
    %7 = arith.truncf %6 : vector<32x96xf32> to vector<32x96xbf16>
    %cst = arith.constant dense<0.000000e+00> : vector<16x96xf32>
    %8 = tpu.matmul %5, %7, %cst {dimension_numbers = #tpu.dot_dimension_numbers<[1], [0], [0], [1], [0, 0, 1, 1], [], []>} : vector<16x32xbf16>, vector<32x96xbf16>, vector<16x96xf32> -> vector<16x96xf32>
    %9 = arith.addf %3, %8 : vector<16x96xf32>
    %c0_6 = arith.constant 0 : index
    %c0_7 = arith.constant 0 : index
    %10 = vector.load %arg7[%c0_6, %c0_7] : memref<16x96xf32, #tpu.memory_space<vmem>>, vector<16x96xf32>
    tpu.vector_store %arg7[%c0_6, %c0_7], %9 {strides = array<i32>} : memref<16x96xf32, #tpu.memory_space<vmem>>, vector<16x96xf32>,
    %c0_i32_8 = arith.constant 0 : i32
    %11 = arith.cmpi eq, %arg2, %c0_i32_8 : i32
    %12 = arith.extui %11 : i1 to i32
    %c0_i32_9 = arith.constant 0 : i32
    %13 = arith.cmpi ne, %12, %c0_i32_9 : i32
    scf.if %13 {
      %c0_10 = arith.constant 0 : index
      %c0_11 = arith.constant 0 : index
      %14 = vector.load %arg7[%c0_10, %c0_11] : memref<16x96xf32, #tpu.memory_space<vmem>>, vector<16x96xf32>
      %c0_12 = arith.constant 0 : index
      %c0_13 = arith.constant 0 : index
      %15 = vector.load %arg5[%c0_12, %c0_13] : memref<1x96xf32, #tpu.memory_space<vmem>>, vector<1x96xf32>
      %16 = vector.broadcast %15 : vector<1x96xf32> to vector<16x96xf32>
      %17 = arith.addf %14, %16 : vector<16x96xf32>
      %c0_14 = arith.constant 0 : index
      %c0_15 = arith.constant 0 : index
      %18 = vector.load %arg6[%c0_14, %c0_15] : memref<16x96xf32, #tpu.memory_space<vmem>>, vector<16x96xf32>
      tpu.vector_store %arg6[%c0_14, %c0_15], %17 {strides = array<i32>} : memref<16x96xf32, #tpu.memory_space<vmem>>, vector<16x96xf32>,
    } else {
    }
    return
  }
  func.func @transform_0(%arg0: i32, %arg1: i32, %arg2: i32) -> (i32, i32) {
    %c0_i32 = arith.constant 0 : i32
    return %arg0, %arg2 : i32, i32
  }
  func.func @transform_1(%arg0: i32, %arg1: i32, %arg2: i32) -> (i32, i32) {
    %c0_i32 = arith.constant 0 : i32
    return %arg2, %arg1 : i32, i32
  }
  func.func @transform_2(%arg0: i32, %arg1: i32, %arg2: i32) -> (i32, i32) {
    %c0_i32 = arith.constant 0 : i32
    %c0_i32_0 = arith.constant 0 : i32
    return %c0_i32, %arg1 : i32, i32
  }
  func.func @transform_3(%arg0: i32, %arg1: i32, %arg2: i32) -> (i32, i32) {
    %c0_i32 = arith.constant 0 : i32
    return %arg0, %arg1 : i32, i32
  }
}

</mosaic_0001>

<llo_original>
// kernel: tpu_custom_call.1
$region0: #{tpu_custom_call.1}
  #allocation0 [shape = 'u32[]', space=smem, size = 0x4, offset = 0x4, fixed_abs, tag = 'smem constant byte address 0x4 - core index']
  #allocation1 [shape = 'u32[144,128]{1,0:T(1,128)}', space=vmem, size = 0x12000, scoped, tag = 'internal scratch']
  #allocation2 [shape = 'f32[16,96]{1,0:T(8,128)}', space=vmem, size = 0x2000, scoped, tag = 'scratch operand']
  %s0 = inlined_call_operand.hbm [shape: f32[16,32], index: 0, kind: input, shape index: {}]
  %s1 = inlined_call_operand.hbm [shape: f32[32,96], index: 1, kind: input, shape index: {}]
  %s2 = inlined_call_operand.vmem [shape: f32[1,96], index: 2, kind: input, shape index: {}]
  %s3 = inlined_call_operand.hbm [shape: f32[16,96], index: 3, kind: output, shape index: {}]
  %s4 = sld [smem:[#allocation0]]
  $region38: #{tpu_custom_call.1} parent=0
    _
  %s6 = ssub.s32 1, %s4
  %s7 = scalar_select 0, %s6, %s4
  $region1: #{tpu_custom_call.1} parent=0
    #allocation3 [shape = 'u8[8192]{0}', space=vmem, size = 0x2000, scoped, tag = 'input window, operand 0, single buffered']
    #allocation4 [shape = 's32[1]{0}', space=sflag, size = 0x4, scoped, tag = 'scoped memory for tpu_custom_call.1']
    #allocation5 [shape = 's32[1]{0}', space=sflag, size = 0x4, scoped, tag = 'scoped memory for tpu_custom_call.1']
    #allocation6 [shape = 'u8[16384]{0}', space=vmem, size = 0x4000, scoped, tag = 'input window, operand 1, single buffered']
    #allocation7 [shape = 's32[1]{0}', space=sflag, size = 0x4, scoped, tag = 'scoped memory for tpu_custom_call.1']
    #allocation8 [shape = 'u8[8192]{0}', space=vmem, size = 0x2000, scoped, tag = 'output window, operand 0, single buffered']
    %8 = vsyncpa [#allocation4], 0
    %9 = vsyncpa [#allocation7], 0
    %10 = vsyncpa [#allocation5], 0
    // Predicated region
    $region2: #{tpu_custom_call.1} parent=1 // pred_check
      _
    $region3: #{tpu_custom_call.1} parent=1 // pred_check_branch
      %12 = sbr.rel (0) target = $region5
    $region4: #{tpu_custom_call.1} parent=1 // pred_region
      %s14 = ssub.s32 256, 256
      %15 = vsyncadd [#allocation4], %s14
      %s16 = sshll.u32 [#allocation3], 4
      %s17 = int_to_ptr.vmem [resolvable:$true] %s16
      %22 = dma.hbm_to_vmem [thread:$0]  %s0, 256, %s17, [#allocation4], 128, 128, 8
    $region5: #{tpu_custom_call.1} parent=1 // pred_fallthru
      _
    // Predicated region
    $region6: #{tpu_custom_call.1} parent=1 // pred_check
      _
    $region7: #{tpu_custom_call.1} parent=1 // pred_check_branch
      %24 = sbr.rel (0) target = $region9
    $region8: #{tpu_custom_call.1} parent=1 // pred_region
      %s26 = ssub.s32 512, 512
      %27 = vsyncadd [#allocation7], %s26
      %s28 = sshll.u32 [#allocation6], 4
      %s29 = int_to_ptr.vmem [resolvable:$true] %s28
      %34 = dma.hbm_to_vmem [thread:$0]  %s1, 512, %s29, [#allocation7], 128, 128, 8
    $region9: #{tpu_custom_call.1} parent=1 // pred_fallthru
      _
    // Predicated region
    $region10: #{tpu_custom_call.1} parent=1 // pred_check
      _
    $region11: #{tpu_custom_call.1} parent=1 // pred_check_branch
      %36 = sbr.rel (0) target = $region13
    $region12: #{tpu_custom_call.1} parent=1 // pred_region
      _
    $region13: #{tpu_custom_call.1} parent=1 // pred_fallthru
      _
    // Predicated region
    $region14: #{tpu_custom_call.1} parent=1 // pred_check
      _
    $region15: #{tpu_custom_call.1} parent=1 // pred_check_branch
      %38 = sbr.rel (0) target = $region17
    $region16: #{tpu_custom_call.1} parent=1 // pred_region
      %39 = dma.done [#allocation4], 256
    $region17: #{tpu_custom_call.1} parent=1 // pred_fallthru
      _
    // Predicated region
    $region18: #{tpu_custom_call.1} parent=1 // pred_check
      _
    $region19: #{tpu_custom_call.1} parent=1 // pred_check_branch
      %41 = sbr.rel (0) target = $region21
    $region20: #{tpu_custom_call.1} parent=1 // pred_region
      %42 = dma.done [#allocation7], 512
    $region21: #{tpu_custom_call.1} parent=1 // pred_fallthru
      _
    %p44 = scmp.eq.s32.totalorder 0, 0
    // Predicated region
    $region22: #{tpu_custom_call.1} parent=1 // pred_check
      %p45 = pneg %p44
    $region23: #{tpu_custom_call.1} parent=1 // pred_check_branch
      %47 = sbr.rel (%p45) target = $region25
    $region24: #{tpu_custom_call.1} parent=1 // pred_region
      %vm48 = vcmask 785408
      %49 = vst.msk [vmem:[#allocation2] sm:$0xff] %vm48, 0.0
      %50 = vst.msk [vmem:[#allocation2 + $0x8] sm:$0xff] %vm48, 0.0
    $region25: #{tpu_custom_call.1} parent=1 // pred_fallthru
      _
    %v51 = vld [vmem:[#allocation2] sm:$0xff]
    %v52 = vld [vmem:[#allocation2 + $0x8] sm:$0xff]
    %v53 = vld [vmem:[#allocation3] sm:$0xff]
    %v54 = vld [vmem:[#allocation3 + $0x8] sm:$0xff]
    %v55 = vpack.c.bf16 %v54, %v53
    %v56 = vld [vmem:[#allocation6] sm:$0xff]
    %v57 = vld [vmem:[#allocation6 + $0x8] sm:$0xff]
    %v58 = vld [vmem:[#allocation6 + $0x10] sm:$0xff]
    %v59 = vld [vmem:[#allocation6 + $0x18] sm:$0xff]
    %v60 = vpack.c.bf16 %v57, %v56
    %v61 = vpack.c.bf16 %v59, %v58
    %vm62 = vcmask 261120
    %v64 = vsel %vm62, %v55, 0
    %66 = vmatprep.subr.bf16.mxu0 0
    %67 = vmatpush1.bf16.msra.mxu0 %v60
    %68 = vmatprep.subr.bf16.mxu0 0
    %69 = vmatpush1.bf16.msra.mxu0 %v61
    %70 = vmatprep.subr.bf16.mxu0 0
    %71 = vmatpush1.bf16.msra.mxu0 0
    %72 = vmatprep.subr.bf16.mxu0 0
    %73 = vmatpush1.bf16.msra.mxu0 0
    %74 = vmatprep.subr.bf16.mxu0 0
    %75 = vmatpush1.bf16.msra.mxu0 0
    %76 = vmatprep.subr.bf16.mxu0 0
    %77 = vmatpush1.bf16.msra.mxu0 0
    %78 = vmatprep.subr.bf16.mxu0 0
    %79 = vmatpush1.bf16.msra.mxu0 0
    %80 = vmatprep.subr.bf16.mxu0 0
    %81 = vmatpush1.bf16.msra.mxu0 0
    %82 = vmatprep.subr.bf16.mxu0 0
    %83 = vmatpush1.bf16.msra.mxu0 0
    %84 = vmatprep.subr.bf16.mxu0 0
    %85 = vmatpush1.bf16.msra.mxu0 0
    %86 = vmatprep.subr.bf16.mxu0 0
    %87 = vmatpush1.bf16.msra.mxu0 0
    %88 = vmatprep.subr.bf16.mxu0 0
    %89 = vmatpush1.bf16.msra.mxu0 0
    %90 = vmatprep.subr.bf16.mxu0 0
    %91 = vmatpush1.bf16.msra.mxu0 0
    %92 = vmatprep.subr.bf16.mxu0 0
    %93 = vmatpush1.bf16.msra.mxu0 0
    %94 = vmatprep.subr.bf16.mxu0 0
    %95 = vmatpush1.bf16.msra.mxu0 0
    %96 = vmatprep.subr.bf16.mxu0 0
    %97 = vmatpush1.bf16.msra.mxu0 0
    %98 = vmatprep.mubr.bf16.mxu0 0
    %99 = vmatmul.mubr.bf16.gmra.mrb[0].mxu0 %v64
    %v100 = vpop.f32.mrb[0].mxu0
    %v101 = vadd.f32 0.0, %v100
    %v102 = vpop.f32.mrb[0].mxu0
    %v103 = vpop.f32.mrb[0].mxu0
    %v104 = vadd.f32 0.0, %v103
    %v105 = vpop.f32.mrb[0].mxu0
    %106 = vdwg.mxu0
    %v107 = vadd.f32 %v51, %v101
    %v108 = vadd.f32 %v52, %v104
    %vm109 = vcmask 785408
    %110 = vst.msk [vmem:[#allocation2] sm:$0xff] %vm109, %v107
    %111 = vst.msk [vmem:[#allocation2 + $0x8] sm:$0xff] %vm109, %v108
    // Predicated region
    $region26: #{tpu_custom_call.1} parent=1 // pred_check
      %p112 = pneg %p44
    $region27: #{tpu_custom_call.1} parent=1 // pred_check_branch
      %114 = sbr.rel (%p112) target = $region29
    $region28: #{tpu_custom_call.1} parent=1 // pred_region
      %v115 = vld [vmem:[#allocation2] sm:$0xff]
      %v116 = vld [vmem:[#allocation2 + $0x8] sm:$0xff]
      %v117 = vld [vmem:[%s2] sm:$0x1]
      %v119 = vlaneseq
      %v120 = vshrl.u32 %v119, 7
      %v121 = vsub.s32 0, %v120
      %v122 = vrot.slane %v117, %v121
      %v124 = vadd.f32 %v115, %v122
      %v125 = vadd.f32 %v116, %v122
      %126 = vst.msk [vmem:[#allocation8] sm:$0xff] %vm109, %v124
      %127 = vst.msk [vmem:[#allocation8 + $0x8] sm:$0xff] %vm109, %v125
    $region29: #{tpu_custom_call.1} parent=1 // pred_fallthru
      _
    // Predicated region
    $region30: #{tpu_custom_call.1} parent=1 // pred_check
      _
    $region31: #{tpu_custom_call.1} parent=1 // pred_check_branch
      %129 = sbr.rel (0) target = $region33
    $region32: #{tpu_custom_call.1} parent=1 // pred_region
      %s131 = ssub.s32 256, 256
      %132 = vsyncadd [#allocation5], %s131
      %s133 = sshll.u32 [#allocation8], 4
      %s134 = int_to_ptr.vmem [resolvable:$true] %s133
      %139 = dma.vmem_to_hbm [thread:$0]  %s134, 256, %s3, [#allocation5], 128, 128, 8
    $region33: #{tpu_custom_call.1} parent=1 // pred_fallthru
      _
    // Predicated region
    $region34: #{tpu_custom_call.1} parent=1 // pred_check
      _
    $region35: #{tpu_custom_call.1} parent=1 // pred_check_branch
      %141 = sbr.rel (0) target = $region37
    $region36: #{tpu_custom_call.1} parent=1 // pred_region
      %142 = dma.done [#allocation5], 256
    $region37: #{tpu_custom_call.1} parent=1 // pred_fallthru
      _
    %143 = vsyncpa [#allocation4], 1
    %144 = vsyncpa [#allocation7], 1
    %145 = vsyncpa [#allocation5], 1

</llo_original>
